<compile_context>
chip_gen: v5e
topology: v5e:2x2
jax: 0.10.0
libtpu: 0.0.40
codegen_flags: <defaults>
</compile_context>

<pallas_src>
import functools

import jax
import jax.numpy as jnp
from jax.experimental import pallas as pl
from jax.experimental.pallas import tpu as pltpu

_LANE = 128
_SUBLANE = 8
# ~4 MiB x-blocks: big enough to amortize the ~0.35us per-grid-step overhead
# and approach the HBM roofline; small enough that double-buffered in+out
# blocks (4x) stay far below v7x's 64 MiB physical VMEM.
_TARGET_BLOCK_BYTES = 4 << 20


def _vmem_limit(block_bytes):
    # in + out blocks, double-buffered, plus slack for params / internals.
    need = 4 * block_bytes + (2 << 20)
    return int(min(max(need, 32 << 20), 48 << 20))


def _pick_rows(n_rows, row_bytes):
    """Largest row tile (multiple of 8, or the full extent) within the byte target."""
    if n_rows * row_bytes <= _TARGET_BLOCK_BYTES:
        return int(n_rows)
    rows = (_TARGET_BLOCK_BYTES // row_bytes) // _SUBLANE * _SUBLANE
    return int(max(_SUBLANE, rows))


# ------------------------------ kernels --------------------------------------


def _ln_rows_kernel(x_ref, w_ref, b_ref, o_ref, *, eps):
    # x_ref: (rows, C) -- normalize each row over the lane axis C.
    x = x_ref[...].astype(jnp.float32)
    mean = jnp.mean(x, axis=-1, keepdims=True)
    xc = x - mean
    var = jnp.mean(xc * xc, axis=-1, keepdims=True)
    y = xc * jax.lax.rsqrt(var + eps)
    w = w_ref[...].astype(jnp.float32)
    b = b_ref[...].astype(jnp.float32)
    o_ref[...] = (y * w + b).astype(o_ref.dtype)


def _ln_packed_kernel(x_ref, w_ref, b_ref, o_ref, *, eps, groups, c):
    # x_ref: (rows, groups*C == 128).  `groups` logical rows are packed into
    # each 128-wide lane row so HBM DMA / vld / vst stay lane dense; stats are
    # computed per (row, group) via a grouped view.
    rows = x_ref.shape[0]
    x = x_ref[...].astype(jnp.float32).reshape(rows, groups, c)
    mean = jnp.mean(x, axis=-1, keepdims=True)
    xc = x - mean
    var = jnp.mean(xc * xc, axis=-1, keepdims=True)
    y = xc * jax.lax.rsqrt(var + eps)
    w = w_ref[...].astype(jnp.float32).reshape(1, 1, c)
    b = b_ref[...].astype(jnp.float32).reshape(1, 1, c)
    y = y * w + b
    o_ref[...] = y.reshape(rows, groups * c).astype(o_ref.dtype)


def _ln_cfirst_kernel(x_ref, w_ref, b_ref, o_ref, *, eps):
    # x_ref: (block_b, C, tile_hw) -- normalize over the channel (sublane)
    # axis.  Lane axis (H*W) stays dense; no transposes needed in the wrapper.
    x = x_ref[...].astype(jnp.float32)
    mean = jnp.mean(x, axis=1, keepdims=True)
    xc = x - mean
    var = jnp.mean(xc * xc, axis=1, keepdims=True)
    y = xc * jax.lax.rsqrt(var + eps)
    w = w_ref[...].astype(jnp.float32)  # (1, C, 1)
    b = b_ref[...].astype(jnp.float32)
    o_ref[...] = (y * w + b).astype(o_ref.dtype)


# ------------------------------ wrappers --------------------------------------


def _layer_norm_rows(x2d, weight, bias, eps):
    """LayerNorm over the last axis of a (N, C) array."""
    N, C = x2d.shape
    itemsize = x2d.dtype.itemsize
    w2d = weight.reshape(1, C)
    b2d = bias.reshape(1, C)

    groups = _LANE // C if (C < _LANE and _LANE % C == 0) else 1
    if groups > 1 and N % groups == 0:
        # Lane-dense packing: reinterpret contiguous (N, C) as (N/groups, 128).
        n_rows, width = N // groups, groups * C
        x_in = x2d.reshape(n_rows, width)
        kernel = functools.partial(_ln_packed_kernel, eps=eps, groups=groups, c=C)
    else:
        n_rows, width = N, C
        x_in = x2d
        kernel = functools.partial(_ln_rows_kernel, eps=eps)

    block_rows = _pick_rows(n_rows, width * itemsize)
    grid = (pl.cdiv(n_rows, block_rows),)
    block_bytes = block_rows * width * itemsize

    y = pl.pallas_call(
        kernel,
        out_shape=jax.ShapeDtypeStruct((n_rows, width), x2d.dtype),
        grid=grid,
        in_specs=[
            pl.BlockSpec((block_rows, width), lambda i: (i, 0)),
            # Constant index_map: affine params are fetched once and reused
            # across grid steps (no per-step re-DMA).
            pl.BlockSpec((1, C), lambda i: (0, 0)),
            pl.BlockSpec((1, C), lambda i: (0, 0)),
        ],
        out_specs=pl.BlockSpec((block_rows, width), lambda i: (i, 0)),
        compiler_params=pltpu.CompilerParams(
            dimension_semantics=("parallel",),
            vmem_limit_bytes=_vmem_limit(block_bytes),
        ),
    )(x_in, w2d, b2d)
    return y.reshape(N, C)


def _layer_norm_channels_first(x, weight, bias, eps):
    """LayerNorm over axis 1 of a (B, C, H, W) array -- no transposes."""
    B, C, H, W = x.shape
    HW = H * W
    itemsize = x.dtype.itemsize
    x3d = x.reshape(B, C, HW)
    w3d = weight.reshape(1, C, 1)
    b3d = bias.reshape(1, C, 1)

    img_bytes = C * HW * itemsize
    if img_bytes >= _TARGET_BLOCK_BYTES:
        # Large images: one image per step, tiled over the spatial (lane) axis
        # in multiples of 128 lanes (tail block padded -- positions independent).
        block_b = 1
        col_bytes = C * itemsize
        if HW * col_bytes <= _TARGET_BLOCK_BYTES:
            tile_hw = HW  # full lane extent is always a legal block dim
        else:
            tile_hw = max(_LANE, (_TARGET_BLOCK_BYTES // col_bytes) // _LANE * _LANE)
    else:
        # Small images: pack several batch elements into each block so every
        # grid step still moves ~4 MiB (amortizes per-step overhead and keeps
        # the DMA pipeline busy).  Stats are per (b, hw) position, so packing
        # the batch axis is semantics-preserving.
        tile_hw = HW
        block_b = int(min(B, max(1, _TARGET_BLOCK_BYTES // img_bytes)))

    grid = (pl.cdiv(B, block_b), pl.cdiv(HW, tile_hw))
    block_bytes = block_b * C * tile_hw * itemsize

    kernel = functools.partial(_ln_cfirst_kernel, eps=eps)
    y3d = pl.pallas_call(
        kernel,
        out_shape=jax.ShapeDtypeStruct((B, C, HW), x.dtype),
        grid=grid,
        in_specs=[
            pl.BlockSpec((block_b, C, tile_hw), lambda b, j: (b, 0, j)),
            pl.BlockSpec((1, C, 1), lambda b, j: (0, 0, 0)),
            pl.BlockSpec((1, C, 1), lambda b, j: (0, 0, 0)),
        ],
        out_specs=pl.BlockSpec((block_b, C, tile_hw), lambda b, j: (b, 0, j)),
        compiler_params=pltpu.CompilerParams(
            dimension_semantics=("parallel", "parallel"),
            vmem_limit_bytes=_vmem_limit(block_bytes),
        ),
    )(x3d, w3d, b3d)
    return y3d.reshape(B, C, H, W)


class LayerNormPallas:
    """JAX/Pallas equivalent of the PyTorch LayerNorm module."""

    def __init__(self, normalized_shape, eps=1e-6, data_format="channels_last",
                 weight=None, bias=None):
        if data_format not in ("channels_last", "channels_first"):
            raise NotImplementedError
        self.eps = float(eps)  # module default is 1e-6 (ConvNeXt-style), as in the spec
        self.data_format = data_format
        self.normalized_shape = (normalized_shape,)
        c = normalized_shape
        self.weight = jnp.ones((c,), jnp.float32) if weight is None else weight
        self.bias = jnp.zeros((c,), jnp.float32) if bias is None else bias

    def __call__(self, x):
        c = self.normalized_shape[0]
        if self.data_format == "channels_last":
            orig_shape = x.shape
            x2d = x.reshape(-1, c)
            y2d = _layer_norm_rows(x2d, self.weight, self.bias, self.eps)
            return y2d.reshape(orig_shape)
        # channels_first: (B, C, H, W), normalize over axis 1 in place (no transposes).
        B, C, H, W = x.shape
        assert C == c
        return _layer_norm_channels_first(x, self.weight, self.bias, self.eps)


# ------------------------------ references & demo -----------------------------


def _ref_layernorm_channels_last(x, w, b, eps):
    xf = x.astype(jnp.float32)
    u = jnp.mean(xf, axis=-1, keepdims=True)
    s = jnp.mean((xf - u) ** 2, axis=-1, keepdims=True)
    return ((xf - u) / jnp.sqrt(s + eps)) * w + b


def _ref_layernorm_channels_first(x, w, b, eps):
    xf = x.astype(jnp.float32)
    u = jnp.mean(xf, axis=1, keepdims=True)
    s = jnp.mean((xf - u) ** 2, axis=1, keepdims=True)
    xn = (xf - u) / jnp.sqrt(s + eps)
    return w[None, :, None, None] * xn + b[None, :, None, None]


if __name__ == "__main__":
    key = jax.random.PRNGKey(0)
    k1, k2, k3, k4, k5, k6, k7 = jax.random.split(key, 7)
    eps = 1e-6

    # --- channels_last, C=32 (lane-packed path): x is (B, H, W, C) ---
    C = 32
    weight = 1.0 + 0.1 * jax.random.normal(k3, (C,), jnp.float32)
    bias = 0.1 * jax.random.normal(k4, (C,), jnp.float32)
    x_last = jax.random.normal(k1, (2, 8, 8, C), jnp.float32)
    ln_last = LayerNormPallas(C, eps=eps, data_format="channels_last",
                              weight=weight, bias=bias)
    y_last = jax.block_until_ready(ln_last(x_last))
    y_last_ref = _ref_layernorm_channels_last(x_last, weight, bias, eps)
    assert jnp.allclose(y_last, y_last_ref, atol=1e-5, rtol=1e-5), "channels_last mismatch"

    # --- channels_first, C=32 (sublane-normalization kernel, batch-packed block) ---
    x_first = jax.random.normal(k2, (2, C, 8, 8), jnp.float32)
    ln_first = LayerNormPallas(C, eps=eps, data_format="channels_first",
                               weight=weight, bias=bias)
    y_first = jax.block_until_ready(ln_first(x_first))
    y_first_ref = _ref_layernorm_channels_first(x_first, weight, bias, eps)
    assert jnp.allclose(y_first, y_first_ref, atol=1e-5, rtol=1e-5), "channels_first mismatch"

    # --- channels_last, C=48 (plain fallback path: 128 % 48 != 0) ---
    C2 = 48
    weight2 = 1.0 + 0.1 * jax.random.normal(k6, (C2,), jnp.float32)
    bias2 = 0.1 * jax.random.normal(k7, (C2,), jnp.float32)
    x_last2 = jax.random.normal(k5, (2, 4, 4, C2), jnp.float32)
    ln_last2 = LayerNormPallas(C2, eps=eps, data_format="channels_last",
                               weight=weight2, bias=bias2)
    y_last2 = jax.block_until_ready(ln_last2(x_last2))
    y_last2_ref = _ref_layernorm_channels_last(x_last2, weight2, bias2, eps)
    assert jnp.allclose(y_last2, y_last2_ref, atol=1e-5, rtol=1e-5), "channels_last C=48 mismatch"

    print("KERNEL_OK")
</pallas_src>

<mosaic_0001>
module attributes {stable_mosaic.version = 11 : i64} {
  func.func @_ln_packed_kernel(%arg0: i32, %arg1: memref<32x128xf32, #tpu.memory_space<vmem>>, %arg2: memref<1x32xf32, #tpu.memory_space<vmem>>, %arg3: memref<1x32xf32, #tpu.memory_space<vmem>>, %arg4: memref<32x128xf32, #tpu.memory_space<vmem>>) attributes {dimension_semantics = [#tpu.dimension_semantics<parallel>], iteration_bounds = array<i64: 1>, scalar_prefetch = 0 : i64, scratch_operands = 0 : i64, tpu.core_type = #tpu.core_type<tc>, window_params = [{transform_indices = @transform_0, window_bounds = array<i64: 32, 128>}, {pipeline_mode = #tpu.pipeline_mode<synchronous>, transform_indices = @transform_1, window_bounds = array<i64: 1, 32>}, {pipeline_mode = #tpu.pipeline_mode<synchronous>, transform_indices = @transform_2, window_bounds = array<i64: 1, 32>}, {transform_indices = @transform_3, window_bounds = array<i64: 32, 128>}]} {
    %c0 = arith.constant 0 : index
    %c0_0 = arith.constant 0 : index
    %0 = vector.load %arg1[%c0, %c0_0] : memref<32x128xf32, #tpu.memory_space<vmem>>, vector<32x128xf32>
    %1 = vector.shape_cast %0 : vector<32x128xf32> to vector<32x4x32xf32>
    %cst = arith.constant dense<0.000000e+00> : vector<32x4xf32>
    %2 = vector.multi_reduction <add>, %1, %cst [2] : vector<32x4x32xf32> to vector<32x4xf32>
    %3 = vector.shape_cast %2 : vector<32x4xf32> to vector<32x4x1xf32>
    %cst_1 = arith.constant 3.200000e+01 : f32
    %4 = vector.broadcast %cst_1 : f32 to vector<32x4x1xf32>
    %5 = arith.divf %3, %4 : vector<32x4x1xf32>
    %6 = vector.broadcast %5 : vector<32x4x1xf32> to vector<32x4x32xf32>
    %7 = arith.subf %1, %6 : vector<32x4x32xf32>
    %8 = arith.mulf %7, %7 : vector<32x4x32xf32>
    %cst_2 = arith.constant dense<0.000000e+00> : vector<32x4xf32>
    %9 = vector.multi_reduction <add>, %8, %cst_2 [2] : vector<32x4x32xf32> to vector<32x4xf32>
    %10 = vector.shape_cast %9 : vector<32x4xf32> to vector<32x4x1xf32>
    %cst_3 = arith.constant 3.200000e+01 : f32
    %11 = vector.broadcast %cst_3 : f32 to vector<32x4x1xf32>
    %12 = arith.divf %10, %11 : vector<32x4x1xf32>
    %cst_4 = arith.constant 9.99999997E-7 : f32
    %13 = vector.broadcast %cst_4 : f32 to vector<32x4x1xf32>
    %14 = arith.addf %12, %13 : vector<32x4x1xf32>
    %15 = math.rsqrt %14 : vector<32x4x1xf32>
    %16 = vector.broadcast %15 : vector<32x4x1xf32> to vector<32x4x32xf32>
    %17 = arith.mulf %7, %16 : vector<32x4x32xf32>
    %c0_5 = arith.constant 0 : index
    %c0_6 = arith.constant 0 : index
    %18 = vector.load %arg2[%c0_5, %c0_6] : memref<1x32xf32, #tpu.memory_space<vmem>>, vector<1x32xf32>
    %19 = vector.shape_cast %18 : vector<1x32xf32> to vector<1x1x32xf32>
    %c0_7 = arith.constant 0 : index
    %c0_8 = arith.constant 0 : index
    %20 = vector.load %arg3[%c0_7, %c0_8] : memref<1x32xf32, #tpu.memory_space<vmem>>, vector<1x32xf32>
    %21 = vector.shape_cast %20 : vector<1x32xf32> to vector<1x1x32xf32>
    %22 = vector.broadcast %19 : vector<1x1x32xf32> to vector<32x4x32xf32>
    %23 = arith.mulf %17, %22 : vector<32x4x32xf32>
    %24 = vector.broadcast %21 : vector<1x1x32xf32> to vector<32x4x32xf32>
    %25 = arith.addf %23, %24 : vector<32x4x32xf32>
    %26 = vector.shape_cast %25 : vector<32x4x32xf32> to vector<32x128xf32>
    %c0_9 = arith.constant 0 : index
    %c0_10 = arith.constant 0 : index
    %27 = vector.load %arg4[%c0_9, %c0_10] : memref<32x128xf32, #tpu.memory_space<vmem>>, vector<32x128xf32>
    tpu.vector_store %arg4[%c0_9, %c0_10], %26 {strides = array<i32>} : memref<32x128xf32, #tpu.memory_space<vmem>>, vector<32x128xf32>,
    return
  }
  func.func @transform_0(%arg0: i32) -> (i32, i32) {
    %c0_i32 = arith.constant 0 : i32
    %c0_i32_0 = arith.constant 0 : i32
    return %arg0, %c0_i32 : i32, i32
  }
  func.func @transform_1(%arg0: i32) -> (i32, i32) {
    %c0_i32 = arith.constant 0 : i32
    %c0_i32_0 = arith.constant 0 : i32
    %c0_i32_1 = arith.constant 0 : i32
    return %c0_i32, %c0_i32_0 : i32, i32
  }
  func.func @transform_2(%arg0: i32) -> (i32, i32) {
    %c0_i32 = arith.constant 0 : i32
    %c0_i32_0 = arith.constant 0 : i32
    %c0_i32_1 = arith.constant 0 : i32
    return %c0_i32, %c0_i32_0 : i32, i32
  }
  func.func @transform_3(%arg0: i32) -> (i32, i32) {
    %c0_i32 = arith.constant 0 : i32
    %c0_i32_0 = arith.constant 0 : i32
    return %arg0, %c0_i32 : i32, i32
  }
}

</mosaic_0001>

<llo_original>
// kernel: tpu_custom_call.1
$region0: #{tpu_custom_call.1}
  #allocation0 [shape = 'u32[]', space=smem, size = 0x4, offset = 0x4, fixed_abs, tag = 'smem constant byte address 0x4 - core index']
  #allocation1 [shape = 'u32[72,128]{1,0:T(1,128)}', space=vmem, size = 0x9000, scoped, tag = 'internal scratch']
  %s0 = inlined_call_operand.hbm [shape: f32[32,128], index: 0, kind: input, shape index: {}]
  %s1 = inlined_call_operand.hbm [shape: f32[1,32], index: 1, kind: input, shape index: {}]
  %s2 = inlined_call_operand.vmem [shape: f32[1,32], index: 2, kind: input, shape index: {}]
  %s3 = inlined_call_operand.hbm [shape: f32[32,128], index: 3, kind: output, shape index: {}]
  %s4 = sld [smem:[#allocation0]]
  $region30: #{tpu_custom_call.1} parent=0
    _
  %s6 = ssub.s32 1, %s4
  %s7 = scalar_select 0, %s6, %s4
  $region1: #{tpu_custom_call.1} parent=0
    #allocation2 [shape = 'u8[16384]{0}', space=vmem, size = 0x4000, scoped, tag = 'input window, operand 0, single buffered']
    #allocation3 [shape = 's32[1]{0}', space=sflag, size = 0x4, scoped, tag = 'scoped memory for tpu_custom_call.1']
    #allocation4 [shape = 's32[1]{0}', space=sflag, size = 0x4, scoped, tag = 'scoped memory for tpu_custom_call.1']
    #allocation5 [shape = 'u8[512]{0}', space=vmem, size = 0x400, scoped, tag = 'input window, operand 1, single buffered']
    #allocation6 [shape = 's32[1]{0}', space=sflag, size = 0x4, scoped, tag = 'scoped memory for tpu_custom_call.1']
    #allocation7 [shape = 'u8[16384]{0}', space=vmem, size = 0x4000, scoped, tag = 'output window, operand 0, single buffered']
    %8 = vsyncpa [#allocation3], 0
    %9 = vsyncpa [#allocation6], 0
    %10 = vsyncpa [#allocation4], 0
    // Predicated region
    $region2: #{tpu_custom_call.1} parent=1 // pred_check
      _
    $region3: #{tpu_custom_call.1} parent=1 // pred_check_branch
      %12 = sbr.rel (0) target = $region5
    $region4: #{tpu_custom_call.1} parent=1 // pred_region
      %14 = vsyncadd [#allocation3], 0
      %s15 = sshll.u32 %s0, 4
      %s16 = int_to_ptr.hbm [resolvable:$true] %s15
      %s17 = sshll.u32 [#allocation2], 4
      %s18 = int_to_ptr.vmem [resolvable:$true] %s17
      %23 = dma.hbm_to_vmem [thread:$0]  %s16, 512, %s18, [#allocation3], 128, 128, 8
    $region5: #{tpu_custom_call.1} parent=1 // pred_fallthru
      _
    // Predicated region
    $region6: #{tpu_custom_call.1} parent=1 // pred_check
      _
    $region7: #{tpu_custom_call.1} parent=1 // pred_check_branch
      %25 = sbr.rel (0) target = $region9
    $region8: #{tpu_custom_call.1} parent=1 // pred_region
      %27 = vsyncadd [#allocation6], 0
      %s29 = sshll.u32 %s1, 4
      %s30 = int_to_ptr.hbm [resolvable:$true] %s29
      %s31 = sshll.u32 [#allocation5], 4
      %s32 = int_to_ptr.vmem [resolvable:$true] %s31
      %34 = dma.hbm_to_vmem [thread:$0]  %s30, 16, %s32, [#allocation6]
    $region9: #{tpu_custom_call.1} parent=1 // pred_fallthru
      _
    // Predicated region
    $region10: #{tpu_custom_call.1} parent=1 // pred_check
      _
    $region11: #{tpu_custom_call.1} parent=1 // pred_check_branch
      %36 = sbr.rel (0) target = $region13
    $region12: #{tpu_custom_call.1} parent=1 // pred_region
      _
    $region13: #{tpu_custom_call.1} parent=1 // pred_fallthru
      _
    // Predicated region
    $region14: #{tpu_custom_call.1} parent=1 // pred_check
      _
    $region15: #{tpu_custom_call.1} parent=1 // pred_check_branch
      %38 = sbr.rel (0) target = $region17
    $region16: #{tpu_custom_call.1} parent=1 // pred_region
      %40 = dma.done [#allocation3], 512
    $region17: #{tpu_custom_call.1} parent=1 // pred_fallthru
      _
    // Predicated region
    $region18: #{tpu_custom_call.1} parent=1 // pred_check
      _
    $region19: #{tpu_custom_call.1} parent=1 // pred_check_branch
      %42 = sbr.rel (0) target = $region21
    $region20: #{tpu_custom_call.1} parent=1 // pred_region
      %44 = dma.done [#allocation6], 16
    $region21: #{tpu_custom_call.1} parent=1 // pred_fallthru
      _
    %v45 = vld [vmem:[#allocation2] sm:$0xff]
    %v46 = vld [vmem:[#allocation2 + $0x8] sm:$0xff]
    %v47 = vld [vmem:[#allocation2 + $0x10] sm:$0xff]
    %v48 = vld [vmem:[#allocation2 + $0x18] sm:$0xff]
    %53 = vrot.lane.b32.xlu0 %v45, 96
    %v54 = vpop.permute.xlu0 %53
    %55 = vrot.lane.b32.xlu0 %v46, 96
    %v56 = vpop.permute.xlu0 %55
    %57 = vrot.lane.b32.xlu0 %v47, 96
    %v58 = vpop.permute.xlu0 %57
    %59 = vrot.lane.b32.xlu0 %v48, 96
    %v60 = vpop.permute.xlu0 %59
    %65 = vrot.lane.b32.xlu0 %v45, 64
    %v66 = vpop.permute.xlu0 %65
    %67 = vrot.lane.b32.xlu0 %v46, 64
    %v68 = vpop.permute.xlu0 %67
    %69 = vrot.lane.b32.xlu0 %v47, 64
    %v70 = vpop.permute.xlu0 %69
    %71 = vrot.lane.b32.xlu0 %v48, 64
    %v72 = vpop.permute.xlu0 %71
    %77 = vrot.lane.b32.xlu0 %v45, 32
    %v78 = vpop.permute.xlu0 %77
    %79 = vrot.lane.b32.xlu0 %v46, 32
    %v80 = vpop.permute.xlu0 %79
    %81 = vrot.lane.b32.xlu0 %v47, 32
    %v82 = vpop.permute.xlu0 %81
    %83 = vrot.lane.b32.xlu0 %v48, 32
    %v84 = vpop.permute.xlu0 %83
    %v89 = vrot.slane %v66, 4
    %vm90 = vcmask 1047556
    %v91 = vsel %vm90, %v89, %v45
    %v92 = vrot.slane %v45, 4
    %v93 = vsel %vm90, %v66, %v92
    %v95 = vunpack.c.l.s4 1983009808
    %v96 = vunpack.c.0.s8 %v95
    %v97 = vperm.slane %v91, %v96
    %v99 = vunpack.c.l.s4 1983009808
    %v100 = vunpack.c.0.s8 %v99
    %v101 = vperm.slane %v93, %v100
    %v102 = vrot.slane %v78, 4
    %v103 = vsel %vm90, %v102, %v54
    %v104 = vrot.slane %v54, 4
    %v105 = vsel %vm90, %v78, %v104
    %v107 = vunpack.c.l.s4 1983009808
    %v108 = vunpack.c.0.s8 %v107
    %v109 = vperm.slane %v103, %v108
    %v111 = vunpack.c.l.s4 1983009808
    %v112 = vunpack.c.0.s8 %v111
    %v113 = vperm.slane %v105, %v112
    %v114 = vrot.slane %v109, 4
    %v115 = vsel %vm90, %v114, %v97
    %v116 = vrot.slane %v97, 4
    %v117 = vsel %vm90, %v109, %v116
    %v119 = vunpack.c.l.s4 1934713408
    %v120 = vunpack.c.0.s8 %v119
    %v121 = vperm.slane %v115, %v120
    %v123 = vunpack.c.l.s4 1934713408
    %v124 = vunpack.c.0.s8 %v123
    %v125 = vperm.slane %v117, %v124
    %v126 = vrot.slane %v113, 4
    %v127 = vsel %vm90, %v126, %v101
    %v128 = vrot.slane %v101, 4
    %v129 = vsel %vm90, %v113, %v128
    %v131 = vunpack.c.l.s4 1934713408
    %v132 = vunpack.c.0.s8 %v131
    %v133 = vperm.slane %v127, %v132
    %v135 = vunpack.c.l.s4 1934713408
    %v136 = vunpack.c.0.s8 %v135
    %v137 = vperm.slane %v129, %v136
    %v138 = vrot.slane %v121, 4
    %v139 = vsel %vm90, 0.0, %v138
    %v140 = vrot.slane %v125, 4
    %v141 = vsel %vm90, 0.0, %v140
    %v142 = vrot.slane %v133, 4
    %v143 = vsel %vm90, 0.0, %v142
    %v144 = vrot.slane %v137, 4
    %v145 = vsel %vm90, 0.0, %v144
    %v146 = vrot.slane %v68, 4
    %v147 = vsel %vm90, %v146, %v46
    %v148 = vrot.slane %v46, 4
    %v149 = vsel %vm90, %v68, %v148
    %v151 = vunpack.c.l.s4 1983009808
    %v152 = vunpack.c.0.s8 %v151
    %v153 = vperm.slane %v147, %v152
    %v155 = vunpack.c.l.s4 1983009808
    %v156 = vunpack.c.0.s8 %v155
    %v157 = vperm.slane %v149, %v156
    %v158 = vrot.slane %v80, 4
    %v159 = vsel %vm90, %v158, %v56
    %v160 = vrot.slane %v56, 4
    %v161 = vsel %vm90, %v80, %v160
    %v163 = vunpack.c.l.s4 1983009808
    %v164 = vunpack.c.0.s8 %v163
    %v165 = vperm.slane %v159, %v164
    %v167 = vunpack.c.l.s4 1983009808
    %v168 = vunpack.c.0.s8 %v167
    %v169 = vperm.slane %v161, %v168
    %v170 = vrot.slane %v165, 4
    %v171 = vsel %vm90, %v170, %v153
    %v172 = vrot.slane %v153, 4
    %v173 = vsel %vm90, %v165, %v172
    %v175 = vunpack.c.l.s4 1934713408
    %v176 = vunpack.c.0.s8 %v175
    %v177 = vperm.slane %v171, %v176
    %v179 = vunpack.c.l.s4 1934713408
    %v180 = vunpack.c.0.s8 %v179
    %v181 = vperm.slane %v173, %v180
    %v182 = vrot.slane %v169, 4
    %v183 = vsel %vm90, %v182, %v157
    %v184 = vrot.slane %v157, 4
    %v185 = vsel %vm90, %v169, %v184
    %v187 = vunpack.c.l.s4 1934713408
    %v188 = vunpack.c.0.s8 %v187
    %v189 = vperm.slane %v183, %v188
    %v191 = vunpack.c.l.s4 1934713408
    %v192 = vunpack.c.0.s8 %v191
    %v193 = vperm.slane %v185, %v192
    %v194 = vrot.slane %v177, 4
    %v195 = vsel %vm90, 0.0, %v194
    %v196 = vrot.slane %v181, 4
    %v197 = vsel %vm90, 0.0, %v196
    %v198 = vrot.slane %v189, 4
    %v199 = vsel %vm90, 0.0, %v198
    %v200 = vrot.slane %v193, 4
    %v201 = vsel %vm90, 0.0, %v200
    %v202 = vrot.slane %v70, 4
    %v203 = vsel %vm90, %v202, %v47
    %v204 = vrot.slane %v47, 4
    %v205 = vsel %vm90, %v70, %v204
    %v207 = vunpack.c.l.s4 1983009808
    %v208 = vunpack.c.0.s8 %v207
    %v209 = vperm.slane %v203, %v208
    %v211 = vunpack.c.l.s4 1983009808
    %v212 = vunpack.c.0.s8 %v211
    %v213 = vperm.slane %v205, %v212
    %v214 = vrot.slane %v82, 4
    %v215 = vsel %vm90, %v214, %v58
    %v216 = vrot.slane %v58, 4
    %v217 = vsel %vm90, %v82, %v216
    %v219 = vunpack.c.l.s4 1983009808
    %v220 = vunpack.c.0.s8 %v219
    %v221 = vperm.slane %v215, %v220
    %v223 = vunpack.c.l.s4 1983009808
    %v224 = vunpack.c.0.s8 %v223
    %v225 = vperm.slane %v217, %v224
    %v226 = vrot.slane %v221, 4
    %v227 = vsel %vm90, %v226, %v209
    %v228 = vrot.slane %v209, 4
    %v229 = vsel %vm90, %v221, %v228
    %v231 = vunpack.c.l.s4 1934713408
    %v232 = vunpack.c.0.s8 %v231
    %v233 = vperm.slane %v227, %v232
    %v235 = vunpack.c.l.s4 1934713408
    %v236 = vunpack.c.0.s8 %v235
    %v237 = vperm.slane %v229, %v236
    %v238 = vrot.slane %v225, 4
    %v239 = vsel %vm90, %v238, %v213
    %v240 = vrot.slane %v213, 4
    %v241 = vsel %vm90, %v225, %v240
    %v243 = vunpack.c.l.s4 1934713408
    %v244 = vunpack.c.0.s8 %v243
    %v245 = vperm.slane %v239, %v244
    %v247 = vunpack.c.l.s4 1934713408
    %v248 = vunpack.c.0.s8 %v247
    %v249 = vperm.slane %v241, %v248
    %v250 = vrot.slane %v233, 4
    %v251 = vsel %vm90, 0.0, %v250
    %v252 = vrot.slane %v237, 4
    %v253 = vsel %vm90, 0.0, %v252
    %v254 = vrot.slane %v245, 4
    %v255 = vsel %vm90, 0.0, %v254
    %v256 = vrot.slane %v249, 4
    %v257 = vsel %vm90, 0.0, %v256
    %v258 = vrot.slane %v72, 4
    %v259 = vsel %vm90, %v258, %v48
    %v260 = vrot.slane %v48, 4
    %v261 = vsel %vm90, %v72, %v260
    %v263 = vunpack.c.l.s4 1983009808
    %v264 = vunpack.c.0.s8 %v263
    %v265 = vperm.slane %v259, %v264
    %v267 = vunpack.c.l.s4 1983009808
    %v268 = vunpack.c.0.s8 %v267
    %v269 = vperm.slane %v261, %v268
    %v270 = vrot.slane %v84, 4
    %v271 = vsel %vm90, %v270, %v60
    %v272 = vrot.slane %v60, 4
    %v273 = vsel %vm90, %v84, %v272
    %v275 = vunpack.c.l.s4 1983009808
    %v276 = vunpack.c.0.s8 %v275
    %v277 = vperm.slane %v271, %v276
    %v279 = vunpack.c.l.s4 1983009808
    %v280 = vunpack.c.0.s8 %v279
    %v281 = vperm.slane %v273, %v280
    %v282 = vrot.slane %v277, 4
    %v283 = vsel %vm90, %v282, %v265
    %v284 = vrot.slane %v265, 4
    %v285 = vsel %vm90, %v277, %v284
    %v287 = vunpack.c.l.s4 1934713408
    %v288 = vunpack.c.0.s8 %v287
    %v289 = vperm.slane %v283, %v288
    %v291 = vunpack.c.l.s4 1934713408
    %v292 = vunpack.c.0.s8 %v291
    %v293 = vperm.slane %v285, %v292
    %v294 = vrot.slane %v281, 4
    %v295 = vsel %vm90, %v294, %v269
    %v296 = vrot.slane %v269, 4
    %v297 = vsel %vm90, %v281, %v296
    %v299 = vunpack.c.l.s4 1934713408
    %v300 = vunpack.c.0.s8 %v299
    %v301 = vperm.slane %v295, %v300
    %v303 = vunpack.c.l.s4 1934713408
    %v304 = vunpack.c.0.s8 %v303
    %v305 = vperm.slane %v297, %v304
    %v306 = vrot.slane %v289, 4
    %v307 = vsel %vm90, 0.0, %v306
    %v308 = vrot.slane %v293, 4
    %v309 = vsel %vm90, 0.0, %v308
    %v310 = vrot.slane %v301, 4
    %v311 = vsel %vm90, 0.0, %v310
    %v312 = vrot.slane %v305, 4
    %v313 = vsel %vm90, 0.0, %v312
    %vm314 = vcmask 257024
    %v315 = vsel %vm314, %v121, 0.0
    %316 = vadd.xlane.f32.xlu0 %v315
    %v317 = vpop.xlane.xlu0 %316
    %v318 = vsel %vm314, %v139, 0.0
    %319 = vadd.xlane.f32.xlu0 %v318
    %v320 = vpop.xlane.xlu0 %319
    %v321 = vsel %vm314, %v125, 0.0
    %322 = vadd.xlane.f32.xlu0 %v321
    %v323 = vpop.xlane.xlu0 %322
    %v324 = vsel %vm314, %v141, 0.0
    %325 = vadd.xlane.f32.xlu0 %v324
    %v326 = vpop.xlane.xlu0 %325
    %v327 = vsel %vm314, %v133, 0.0
    %328 = vadd.xlane.f32.xlu0 %v327
    %v329 = vpop.xlane.xlu0 %328
    %v330 = vsel %vm314, %v143, 0.0
    %331 = vadd.xlane.f32.xlu0 %v330
    %v332 = vpop.xlane.xlu0 %331
    %v333 = vsel %vm314, %v137, 0.0
    %334 = vadd.xlane.f32.xlu0 %v333
    %v335 = vpop.xlane.xlu0 %334
    %v336 = vsel %vm314, %v145, 0.0
    %337 = vadd.xlane.f32.xlu0 %v336
    %v338 = vpop.xlane.xlu0 %337
    %v339 = vsel %vm314, %v177, 0.0
    %340 = vadd.xlane.f32.xlu0 %v339
    %v341 = vpop.xlane.xlu0 %340
    %v342 = vsel %vm314, %v195, 0.0
    %343 = vadd.xlane.f32.xlu0 %v342
    %v344 = vpop.xlane.xlu0 %343
    %v345 = vsel %vm314, %v181, 0.0
    %346 = vadd.xlane.f32.xlu0 %v345
    %v347 = vpop.xlane.xlu0 %346
    %v348 = vsel %vm314, %v197, 0.0
    %349 = vadd.xlane.f32.xlu0 %v348
    %v350 = vpop.xlane.xlu0 %349
    %v351 = vsel %vm314, %v189, 0.0
    %352 = vadd.xlane.f32.xlu0 %v351
    %v353 = vpop.xlane.xlu0 %352
    %v354 = vsel %vm314, %v199, 0.0
    %355 = vadd.xlane.f32.xlu0 %v354
    %v356 = vpop.xlane.xlu0 %355
    %v357 = vsel %vm314, %v193, 0.0
    %358 = vadd.xlane.f32.xlu0 %v357
    %v359 = vpop.xlane.xlu0 %358
    %v360 = vsel %vm314, %v201, 0.0
    %361 = vadd.xlane.f32.xlu0 %v360
    %v362 = vpop.xlane.xlu0 %361
    %v363 = vsel %vm314, %v233, 0.0
    %364 = vadd.xlane.f32.xlu0 %v363
    %v365 = vpop.xlane.xlu0 %364
    %v366 = vsel %vm314, %v251, 0.0
    %367 = vadd.xlane.f32.xlu0 %v366
    %v368 = vpop.xlane.xlu0 %367
    %v369 = vsel %vm314, %v237, 0.0
    %370 = vadd.xlane.f32.xlu0 %v369
    %v371 = vpop.xlane.xlu0 %370
    %v372 = vsel %vm314, %v253, 0.0
    %373 = vadd.xlane.f32.xlu0 %v372
    %v374 = vpop.xlane.xlu0 %373
    %v375 = vsel %vm314, %v245, 0.0
    %376 = vadd.xlane.f32.xlu0 %v375
    %v377 = vpop.xlane.xlu0 %376
    %v378 = vsel %vm314, %v255, 0.0
    %379 = vadd.xlane.f32.xlu0 %v378
    %v380 = vpop.xlane.xlu0 %379
    %v381 = vsel %vm314, %v249, 0.0
    %382 = vadd.xlane.f32.xlu0 %v381
    %v383 = vpop.xlane.xlu0 %382
    %v384 = vsel %vm314, %v257, 0.0
    %385 = vadd.xlane.f32.xlu0 %v384
    %v386 = vpop.xlane.xlu0 %385
    %v387 = vsel %vm314, %v289, 0.0
    %388 = vadd.xlane.f32.xlu0 %v387
    %v389 = vpop.xlane.xlu0 %388
    %v390 = vsel %vm314, %v307, 0.0
    %391 = vadd.xlane.f32.xlu0 %v390
    %v392 = vpop.xlane.xlu0 %391
    %v393 = vsel %vm314, %v293, 0.0
    %394 = vadd.xlane.f32.xlu0 %v393
    %v395 = vpop.xlane.xlu0 %394
    %v396 = vsel %vm314, %v309, 0.0
    %397 = vadd.xlane.f32.xlu0 %v396
    %v398 = vpop.xlane.xlu0 %397
    %v399 = vsel %vm314, %v301, 0.0
    %400 = vadd.xlane.f32.xlu0 %v399
    %v401 = vpop.xlane.xlu0 %400
    %v402 = vsel %vm314, %v311, 0.0
    %403 = vadd.xlane.f32.xlu0 %v402
    %v404 = vpop.xlane.xlu0 %403
    %v405 = vsel %vm314, %v305, 0.0
    %406 = vadd.xlane.f32.xlu0 %v405
    %v407 = vpop.xlane.xlu0 %406
    %v408 = vsel %vm314, %v313, 0.0
    %409 = vadd.xlane.f32.xlu0 %v408
    %v410 = vpop.xlane.xlu0 %409
    %v411 = vrcp.pop 32.0
    %v412 = vmul.f32 32.0, %v411
    %v413 = vsub.f32 1.0, %v412
    %v414 = vmul.f32 %v411, %v413
    %v415 = vadd.f32 %v411, %v414
    %vm416 = vweird.f32 %v411
    %v417 = vsel %vm416, %v411, %v415
    %v418 = vmul.f32 %v317, %v417
    %v419 = vmul.f32 %v320, %v417
    %v420 = vmul.f32 %v323, %v417
    %v421 = vmul.f32 %v326, %v417
    %v422 = vmul.f32 %v329, %v417
    %v423 = vmul.f32 %v332, %v417
    %v424 = vmul.f32 %v335, %v417
    %v425 = vmul.f32 %v338, %v417
    %v426 = vmul.f32 %v341, %v417
    %v427 = vmul.f32 %v344, %v417
    %v428 = vmul.f32 %v347, %v417
    %v429 = vmul.f32 %v350, %v417
    %v430 = vmul.f32 %v353, %v417
    %v431 = vmul.f32 %v356, %v417
    %v432 = vmul.f32 %v359, %v417
    %v433 = vmul.f32 %v362, %v417
    %v434 = vmul.f32 %v365, %v417
    %v435 = vmul.f32 %v368, %v417
    %v436 = vmul.f32 %v371, %v417
    %v437 = vmul.f32 %v374, %v417
    %v438 = vmul.f32 %v377, %v417
    %v439 = vmul.f32 %v380, %v417
    %v440 = vmul.f32 %v383, %v417
    %v441 = vmul.f32 %v386, %v417
    %v442 = vmul.f32 %v389, %v417
    %v443 = vmul.f32 %v392, %v417
    %v444 = vmul.f32 %v395, %v417
    %v445 = vmul.f32 %v398, %v417
    %v446 = vmul.f32 %v401, %v417
    %v447 = vmul.f32 %v404, %v417
    %v448 = vmul.f32 %v407, %v417
    %v449 = vmul.f32 %v410, %v417
    %v450 = vsub.f32 %v121, %v418
    %v451 = vsub.f32 %v139, %v419
    %v452 = vsub.f32 %v125, %v420
    %v453 = vsub.f32 %v141, %v421
    %v454 = vsub.f32 %v133, %v422
    %v455 = vsub.f32 %v143, %v423
    %v456 = vsub.f32 %v137, %v424
    %v457 = vsub.f32 %v145, %v425
    %v458 = vsub.f32 %v177, %v426
    %v459 = vsub.f32 %v195, %v427
    %v460 = vsub.f32 %v181, %v428
    %v461 = vsub.f32 %v197, %v429
    %v462 = vsub.f32 %v189, %v430
    %v463 = vsub.f32 %v199, %v431
    %v464 = vsub.f32 %v193, %v432
    %v465 = vsub.f32 %v201, %v433
    %v466 = vsub.f32 %v233, %v434
    %v467 = vsub.f32 %v251, %v435
    %v468 = vsub.f32 %v237, %v436
    %v469 = vsub.f32 %v253, %v437
    %v470 = vsub.f32 %v245, %v438
    %v471 = vsub.f32 %v255, %v439
    %v472 = vsub.f32 %v249, %v440
    %v473 = vsub.f32 %v257, %v441
    %v474 = vsub.f32 %v289, %v442
    %v475 = vsub.f32 %v307, %v443
    %v476 = vsub.f32 %v293, %v444
    %v477 = vsub.f32 %v309, %v445
    %v478 = vsub.f32 %v301, %v446
    %v479 = vsub.f32 %v311, %v447
    %v480 = vsub.f32 %v305, %v448
    %v481 = vsub.f32 %v313, %v449
    %v482 = vmul.f32 %v450, %v450
    %v483 = vmul.f32 %v451, %v451
    %v484 = vmul.f32 %v452, %v452
    %v485 = vmul.f32 %v453, %v453
    %v486 = vmul.f32 %v454, %v454
    %v487 = vmul.f32 %v455, %v455
    %v488 = vmul.f32 %v456, %v456
    %v489 = vmul.f32 %v457, %v457
    %v490 = vmul.f32 %v458, %v458
    %v491 = vmul.f32 %v459, %v459
    %v492 = vmul.f32 %v460, %v460
    %v493 = vmul.f32 %v461, %v461
    %v494 = vmul.f32 %v462, %v462
    %v495 = vmul.f32 %v463, %v463
    %v496 = vmul.f32 %v464, %v464
    %v497 = vmul.f32 %v465, %v465
    %v498 = vmul.f32 %v466, %v466
    %v499 = vmul.f32 %v467, %v467
    %v500 = vmul.f32 %v468, %v468
    %v501 = vmul.f32 %v469, %v469
    %v502 = vmul.f32 %v470, %v470
    %v503 = vmul.f32 %v471, %v471
    %v504 = vmul.f32 %v472, %v472
    %v505 = vmul.f32 %v473, %v473
    %v506 = vmul.f32 %v474, %v474
    %v507 = vmul.f32 %v475, %v475
    %v508 = vmul.f32 %v476, %v476
    %v509 = vmul.f32 %v477, %v477
    %v510 = vmul.f32 %v478, %v478
    %v511 = vmul.f32 %v479, %v479
    %v512 = vmul.f32 %v480, %v480
    %v513 = vmul.f32 %v481, %v481
    %v514 = vsel %vm314, %v482, 0.0
    %515 = vadd.xlane.f32.xlu0 %v514
    %v516 = vpop.xlane.xlu0 %515
    %v517 = vsel %vm314, %v483, 0.0
    %518 = vadd.xlane.f32.xlu0 %v517
    %v519 = vpop.xlane.xlu0 %518
    %v520 = vsel %vm314, %v484, 0.0
    %521 = vadd.xlane.f32.xlu0 %v520
    %v522 = vpop.xlane.xlu0 %521
    %v523 = vsel %vm314, %v485, 0.0
    %524 = vadd.xlane.f32.xlu0 %v523
    %v525 = vpop.xlane.xlu0 %524
    %v526 = vsel %vm314, %v486, 0.0
    %527 = vadd.xlane.f32.xlu0 %v526
    %v528 = vpop.xlane.xlu0 %527
    %v529 = vsel %vm314, %v487, 0.0
    %530 = vadd.xlane.f32.xlu0 %v529
    %v531 = vpop.xlane.xlu0 %530
    %v532 = vsel %vm314, %v488, 0.0
    %533 = vadd.xlane.f32.xlu0 %v532
    %v534 = vpop.xlane.xlu0 %533
    %v535 = vsel %vm314, %v489, 0.0
    %536 = vadd.xlane.f32.xlu0 %v535
    %v537 = vpop.xlane.xlu0 %536
    %v538 = vsel %vm314, %v490, 0.0
    %539 = vadd.xlane.f32.xlu0 %v538
    %v540 = vpop.xlane.xlu0 %539
    %v541 = vsel %vm314, %v491, 0.0
    %542 = vadd.xlane.f32.xlu0 %v541
    %v543 = vpop.xlane.xlu0 %542
    %v544 = vsel %vm314, %v492, 0.0
    %545 = vadd.xlane.f32.xlu0 %v544
    %v546 = vpop.xlane.xlu0 %545
    %v547 = vsel %vm314, %v493, 0.0
    %548 = vadd.xlane.f32.xlu0 %v547
    %v549 = vpop.xlane.xlu0 %548
    %v550 = vsel %vm314, %v494, 0.0
    %551 = vadd.xlane.f32.xlu0 %v550
    %v552 = vpop.xlane.xlu0 %551
    %v553 = vsel %vm314, %v495, 0.0
    %554 = vadd.xlane.f32.xlu0 %v553
    %v555 = vpop.xlane.xlu0 %554
    %v556 = vsel %vm314, %v496, 0.0
    %557 = vadd.xlane.f32.xlu0 %v556
    %v558 = vpop.xlane.xlu0 %557
    %v559 = vsel %vm314, %v497, 0.0
    %560 = vadd.xlane.f32.xlu0 %v559
    %v561 = vpop.xlane.xlu0 %560
    %v562 = vsel %vm314, %v498, 0.0
    %563 = vadd.xlane.f32.xlu0 %v562
    %v564 = vpop.xlane.xlu0 %563
    %v565 = vsel %vm314, %v499, 0.0
    %566 = vadd.xlane.f32.xlu0 %v565
    %v567 = vpop.xlane.xlu0 %566
    %v568 = vsel %vm314, %v500, 0.0
    %569 = vadd.xlane.f32.xlu0 %v568
    %v570 = vpop.xlane.xlu0 %569
    %v571 = vsel %vm314, %v501, 0.0
    %572 = vadd.xlane.f32.xlu0 %v571
    %v573 = vpop.xlane.xlu0 %572
    %v574 = vsel %vm314, %v502, 0.0
    %575 = vadd.xlane.f32.xlu0 %v574
    %v576 = vpop.xlane.xlu0 %575
    %v577 = vsel %vm314, %v503, 0.0
    %578 = vadd.xlane.f32.xlu0 %v577
    %v579 = vpop.xlane.xlu0 %578
    %v580 = vsel %vm314, %v504, 0.0
    %581 = vadd.xlane.f32.xlu0 %v580
    %v582 = vpop.xlane.xlu0 %581
    %v583 = vsel %vm314, %v505, 0.0
    %584 = vadd.xlane.f32.xlu0 %v583
    %v585 = vpop.xlane.xlu0 %584
    %v586 = vsel %vm314, %v506, 0.0
    %587 = vadd.xlane.f32.xlu0 %v586
    %v588 = vpop.xlane.xlu0 %587
    %v589 = vsel %vm314, %v507, 0.0
    %590 = vadd.xlane.f32.xlu0 %v589
    %v591 = vpop.xlane.xlu0 %590
    %v592 = vsel %vm314, %v508, 0.0
    %593 = vadd.xlane.f32.xlu0 %v592
    %v594 = vpop.xlane.xlu0 %593
    %v595 = vsel %vm314, %v509, 0.0
    %596 = vadd.xlane.f32.xlu0 %v595
    %v597 = vpop.xlane.xlu0 %596
    %v598 = vsel %vm314, %v510, 0.0
    %599 = vadd.xlane.f32.xlu0 %v598
    %v600 = vpop.xlane.xlu0 %599
    %v601 = vsel %vm314, %v511, 0.0
    %602 = vadd.xlane.f32.xlu0 %v601
    %v603 = vpop.xlane.xlu0 %602
    %v604 = vsel %vm314, %v512, 0.0
    %605 = vadd.xlane.f32.xlu0 %v604
    %v606 = vpop.xlane.xlu0 %605
    %v607 = vsel %vm314, %v513, 0.0
    %608 = vadd.xlane.f32.xlu0 %v607
    %v609 = vpop.xlane.xlu0 %608
    %v610 = vmul.f32 %v516, %v417
    %v611 = vmul.f32 %v519, %v417
    %v612 = vmul.f32 %v522, %v417
    %v613 = vmul.f32 %v525, %v417
    %v614 = vmul.f32 %v528, %v417
    %v615 = vmul.f32 %v531, %v417
    %v616 = vmul.f32 %v534, %v417
    %v617 = vmul.f32 %v537, %v417
    %v618 = vmul.f32 %v540, %v417
    %v619 = vmul.f32 %v543, %v417
    %v620 = vmul.f32 %v546, %v417
    %v621 = vmul.f32 %v549, %v417
    %v622 = vmul.f32 %v552, %v417
    %v623 = vmul.f32 %v555, %v417
    %v624 = vmul.f32 %v558, %v417
    %v625 = vmul.f32 %v561, %v417
    %v626 = vmul.f32 %v564, %v417
    %v627 = vmul.f32 %v567, %v417
    %v628 = vmul.f32 %v570, %v417
    %v629 = vmul.f32 %v573, %v417
    %v630 = vmul.f32 %v576, %v417
    %v631 = vmul.f32 %v579, %v417
    %v632 = vmul.f32 %v582, %v417
    %v633 = vmul.f32 %v585, %v417
    %v634 = vmul.f32 %v588, %v417
    %v635 = vmul.f32 %v591, %v417
    %v636 = vmul.f32 %v594, %v417
    %v637 = vmul.f32 %v597, %v417
    %v638 = vmul.f32 %v600, %v417
    %v639 = vmul.f32 %v603, %v417
    %v640 = vmul.f32 %v606, %v417
    %v641 = vmul.f32 %v609, %v417
    %v642 = vadd.f32 %v610, 1e-06
    %v643 = vadd.f32 %v611, 1e-06
    %v644 = vadd.f32 %v612, 1e-06
    %v645 = vadd.f32 %v613, 1e-06
    %v646 = vadd.f32 %v614, 1e-06
    %v647 = vadd.f32 %v615, 1e-06
    %v648 = vadd.f32 %v616, 1e-06
    %v649 = vadd.f32 %v617, 1e-06
    %v650 = vadd.f32 %v618, 1e-06
    %v651 = vadd.f32 %v619, 1e-06
    %v652 = vadd.f32 %v620, 1e-06
    %v653 = vadd.f32 %v621, 1e-06
    %v654 = vadd.f32 %v622, 1e-06
    %v655 = vadd.f32 %v623, 1e-06
    %v656 = vadd.f32 %v624, 1e-06
    %v657 = vadd.f32 %v625, 1e-06
    %v658 = vadd.f32 %v626, 1e-06
    %v659 = vadd.f32 %v627, 1e-06
    %v660 = vadd.f32 %v628, 1e-06
    %v661 = vadd.f32 %v629, 1e-06
    %v662 = vadd.f32 %v630, 1e-06
    %v663 = vadd.f32 %v631, 1e-06
    %v664 = vadd.f32 %v632, 1e-06
    %v665 = vadd.f32 %v633, 1e-06
    %v666 = vadd.f32 %v634, 1e-06
    %v667 = vadd.f32 %v635, 1e-06
    %v668 = vadd.f32 %v636, 1e-06
    %v669 = vadd.f32 %v637, 1e-06
    %v670 = vadd.f32 %v638, 1e-06
    %v671 = vadd.f32 %v639, 1e-06
    %v672 = vadd.f32 %v640, 1e-06
    %v673 = vadd.f32 %v641, 1e-06
    %v674 = vrsqrt.pop %v642
    %v675 = vmul.f32 %v674, %v642
    %v676 = vmul.f32 %v675, %v674
    %v677 = vmul.f32 0.5, %v676
    %v678 = vsub.f32 1.5, %v677
    %v679 = vmul.f32 %v674, %v678
    %vm680 = vweird.f32 %v642
    %vm681 = vweird.f32 %v674
    %vm682 = vmor %vm680, %vm681
    %v683 = vsel %vm682, %v674, %v679
    %v684 = vrsqrt.pop %v643
    %v685 = vmul.f32 %v684, %v643
    %v686 = vmul.f32 %v685, %v684
    %v687 = vmul.f32 0.5, %v686
    %v688 = vsub.f32 1.5, %v687
    %v689 = vmul.f32 %v684, %v688
    %vm690 = vweird.f32 %v643
    %vm691 = vweird.f32 %v684
    %vm692 = vmor %vm690, %vm691
    %v693 = vsel %vm692, %v684, %v689
    %v694 = vrsqrt.pop %v644
    %v695 = vmul.f32 %v694, %v644
    %v696 = vmul.f32 %v695, %v694
    %v697 = vmul.f32 0.5, %v696
    %v698 = vsub.f32 1.5, %v697
    %v699 = vmul.f32 %v694, %v698
    %vm700 = vweird.f32 %v644
    %vm701 = vweird.f32 %v694
    %vm702 = vmor %vm700, %vm701
    %v703 = vsel %vm702, %v694, %v699
    %v704 = vrsqrt.pop %v645
    %v705 = vmul.f32 %v704, %v645
    %v706 = vmul.f32 %v705, %v704
    %v707 = vmul.f32 0.5, %v706
    %v708 = vsub.f32 1.5, %v707
    %v709 = vmul.f32 %v704, %v708
    %vm710 = vweird.f32 %v645
    %vm711 = vweird.f32 %v704
    %vm712 = vmor %vm710, %vm711
    %v713 = vsel %vm712, %v704, %v709
    %v714 = vrsqrt.pop %v646
    %v715 = vmul.f32 %v714, %v646
    %v716 = vmul.f32 %v715, %v714
    %v717 = vmul.f32 0.5, %v716
    %v718 = vsub.f32 1.5, %v717
    %v719 = vmul.f32 %v714, %v718
    %vm720 = vweird.f32 %v646
    %vm721 = vweird.f32 %v714
    %vm722 = vmor %vm720, %vm721
    %v723 = vsel %vm722, %v714, %v719
    %v724 = vrsqrt.pop %v647
    %v725 = vmul.f32 %v724, %v647
    %v726 = vmul.f32 %v725, %v724
    %v727 = vmul.f32 0.5, %v726
    %v728 = vsub.f32 1.5, %v727
    %v729 = vmul.f32 %v724, %v728
    %vm730 = vweird.f32 %v647
    %vm731 = vweird.f32 %v724
    %vm732 = vmor %vm730, %vm731
    %v733 = vsel %vm732, %v724, %v729
    %v734 = vrsqrt.pop %v648
    %v735 = vmul.f32 %v734, %v648
    %v736 = vmul.f32 %v735, %v734
    %v737 = vmul.f32 0.5, %v736
    %v738 = vsub.f32 1.5, %v737
    %v739 = vmul.f32 %v734, %v738
    %vm740 = vweird.f32 %v648
    %vm741 = vweird.f32 %v734
    %vm742 = vmor %vm740, %vm741
    %v743 = vsel %vm742, %v734, %v739
    %v744 = vrsqrt.pop %v649
    %v745 = vmul.f32 %v744, %v649
    %v746 = vmul.f32 %v745, %v744
    %v747 = vmul.f32 0.5, %v746
    %v748 = vsub.f32 1.5, %v747
    %v749 = vmul.f32 %v744, %v748
    %vm750 = vweird.f32 %v649
    %vm751 = vweird.f32 %v744
    %vm752 = vmor %vm750, %vm751
    %v753 = vsel %vm752, %v744, %v749
    %v754 = vrsqrt.pop %v650
    %v755 = vmul.f32 %v754, %v650
    %v756 = vmul.f32 %v755, %v754
    %v757 = vmul.f32 0.5, %v756
    %v758 = vsub.f32 1.5, %v757
    %v759 = vmul.f32 %v754, %v758
    %vm760 = vweird.f32 %v650
    %vm761 = vweird.f32 %v754
    %vm762 = vmor %vm760, %vm761
    %v763 = vsel %vm762, %v754, %v759
    %v764 = vrsqrt.pop %v651
    %v765 = vmul.f32 %v764, %v651
    %v766 = vmul.f32 %v765, %v764
    %v767 = vmul.f32 0.5, %v766
    %v768 = vsub.f32 1.5, %v767
    %v769 = vmul.f32 %v764, %v768
    %vm770 = vweird.f32 %v651
    %vm771 = vweird.f32 %v764
    %vm772 = vmor %vm770, %vm771
    %v773 = vsel %vm772, %v764, %v769
    %v774 = vrsqrt.pop %v652
    %v775 = vmul.f32 %v774, %v652
    %v776 = vmul.f32 %v775, %v774
    %v777 = vmul.f32 0.5, %v776
    %v778 = vsub.f32 1.5, %v777
    %v779 = vmul.f32 %v774, %v778
    %vm780 = vweird.f32 %v652
    %vm781 = vweird.f32 %v774
    %vm782 = vmor %vm780, %vm781
    %v783 = vsel %vm782, %v774, %v779
    %v784 = vrsqrt.pop %v653
    %v785 = vmul.f32 %v784, %v653
    %v786 = vmul.f32 %v785, %v784
    %v787 = vmul.f32 0.5, %v786
    %v788 = vsub.f32 1.5, %v787
    %v789 = vmul.f32 %v784, %v788
    %vm790 = vweird.f32 %v653
    %vm791 = vweird.f32 %v784
    %vm792 = vmor %vm790, %vm791
    %v793 = vsel %vm792, %v784, %v789
    %v794 = vrsqrt.pop %v654
    %v795 = vmul.f32 %v794, %v654
    %v796 = vmul.f32 %v795, %v794
    %v797 = vmul.f32 0.5, %v796
    %v798 = vsub.f32 1.5, %v797
    %v799 = vmul.f32 %v794, %v798
    %vm800 = vweird.f32 %v654
    %vm801 = vweird.f32 %v794
    %vm802 = vmor %vm800, %vm801
    %v803 = vsel %vm802, %v794, %v799
    %v804 = vrsqrt.pop %v655
    %v805 = vmul.f32 %v804, %v655
    %v806 = vmul.f32 %v805, %v804
    %v807 = vmul.f32 0.5, %v806
    %v808 = vsub.f32 1.5, %v807
    %v809 = vmul.f32 %v804, %v808
    %vm810 = vweird.f32 %v655
    %vm811 = vweird.f32 %v804
    %vm812 = vmor %vm810, %vm811
    %v813 = vsel %vm812, %v804, %v809
    %v814 = vrsqrt.pop %v656
    %v815 = vmul.f32 %v814, %v656
    %v816 = vmul.f32 %v815, %v814
    %v817 = vmul.f32 0.5, %v816
    %v818 = vsub.f32 1.5, %v817
    %v819 = vmul.f32 %v814, %v818
    %vm820 = vweird.f32 %v656
    %vm821 = vweird.f32 %v814
    %vm822 = vmor %vm820, %vm821
    %v823 = vsel %vm822, %v814, %v819
    %v824 = vrsqrt.pop %v657
    %v825 = vmul.f32 %v824, %v657
    %v826 = vmul.f32 %v825, %v824
    %v827 = vmul.f32 0.5, %v826
    %v828 = vsub.f32 1.5, %v827
    %v829 = vmul.f32 %v824, %v828
    %vm830 = vweird.f32 %v657
    %vm831 = vweird.f32 %v824
    %vm832 = vmor %vm830, %vm831
    %v833 = vsel %vm832, %v824, %v829
    %v834 = vrsqrt.pop %v658
    %v835 = vmul.f32 %v834, %v658
    %v836 = vmul.f32 %v835, %v834
    %v837 = vmul.f32 0.5, %v836
    %v838 = vsub.f32 1.5, %v837
    %v839 = vmul.f32 %v834, %v838
    %vm840 = vweird.f32 %v658
    %vm841 = vweird.f32 %v834
    %vm842 = vmor %vm840, %vm841
    %v843 = vsel %vm842, %v834, %v839
    %v844 = vrsqrt.pop %v659
    %v845 = vmul.f32 %v844, %v659
    %v846 = vmul.f32 %v845, %v844
    %v847 = vmul.f32 0.5, %v846
    %v848 = vsub.f32 1.5, %v847
    %v849 = vmul.f32 %v844, %v848
    %vm850 = vweird.f32 %v659
    %vm851 = vweird.f32 %v844
    %vm852 = vmor %vm850, %vm851
    %v853 = vsel %vm852, %v844, %v849
    %v854 = vrsqrt.pop %v660
    %v855 = vmul.f32 %v854, %v660
    %v856 = vmul.f32 %v855, %v854
    %v857 = vmul.f32 0.5, %v856
    %v858 = vsub.f32 1.5, %v857
    %v859 = vmul.f32 %v854, %v858
    %vm860 = vweird.f32 %v660
    %vm861 = vweird.f32 %v854
    %vm862 = vmor %vm860, %vm861
    %v863 = vsel %vm862, %v854, %v859
    %v864 = vrsqrt.pop %v661
    %v865 = vmul.f32 %v864, %v661
    %v866 = vmul.f32 %v865, %v864
    %v867 = vmul.f32 0.5, %v866
    %v868 = vsub.f32 1.5, %v867
    %v869 = vmul.f32 %v864, %v868
    %vm870 = vweird.f32 %v661
    %vm871 = vweird.f32 %v864
    %vm872 = vmor %vm870, %vm871
    %v873 = vsel %vm872, %v864, %v869
    %v874 = vrsqrt.pop %v662
    %v875 = vmul.f32 %v874, %v662
    %v876 = vmul.f32 %v875, %v874
    %v877 = vmul.f32 0.5, %v876
    %v878 = vsub.f32 1.5, %v877
    %v879 = vmul.f32 %v874, %v878
    %vm880 = vweird.f32 %v662
    %vm881 = vweird.f32 %v874
    %vm882 = vmor %vm880, %vm881
    %v883 = vsel %vm882, %v874, %v879
    %v884 = vrsqrt.pop %v663
    %v885 = vmul.f32 %v884, %v663
    %v886 = vmul.f32 %v885, %v884
    %v887 = vmul.f32 0.5, %v886
    %v888 = vsub.f32 1.5, %v887
    %v889 = vmul.f32 %v884, %v888
    %vm890 = vweird.f32 %v663
    %vm891 = vweird.f32 %v884
    %vm892 = vmor %vm890, %vm891
    %v893 = vsel %vm892, %v884, %v889
    %v894 = vrsqrt.pop %v664
    %v895 = vmul.f32 %v894, %v664
    %v896 = vmul.f32 %v895, %v894
    %v897 = vmul.f32 0.5, %v896
    %v898 = vsub.f32 1.5, %v897
    %v899 = vmul.f32 %v894, %v898
    %vm900 = vweird.f32 %v664
    %vm901 = vweird.f32 %v894
    %vm902 = vmor %vm900, %vm901
    %v903 = vsel %vm902, %v894, %v899
    %v904 = vrsqrt.pop %v665
    %v905 = vmul.f32 %v904, %v665
    %v906 = vmul.f32 %v905, %v904
    %v907 = vmul.f32 0.5, %v906
    %v908 = vsub.f32 1.5, %v907
    %v909 = vmul.f32 %v904, %v908
    %vm910 = vweird.f32 %v665
    %vm911 = vweird.f32 %v904
    %vm912 = vmor %vm910, %vm911
    %v913 = vsel %vm912, %v904, %v909
    %v914 = vrsqrt.pop %v666
    %v915 = vmul.f32 %v914, %v666
    %v916 = vmul.f32 %v915, %v914
    %v917 = vmul.f32 0.5, %v916
    %v918 = vsub.f32 1.5, %v917
    %v919 = vmul.f32 %v914, %v918
    %vm920 = vweird.f32 %v666
    %vm921 = vweird.f32 %v914
    %vm922 = vmor %vm920, %vm921
    %v923 = vsel %vm922, %v914, %v919
    %v924 = vrsqrt.pop %v667
    %v925 = vmul.f32 %v924, %v667
    %v926 = vmul.f32 %v925, %v924
    %v927 = vmul.f32 0.5, %v926
    %v928 = vsub.f32 1.5, %v927
    %v929 = vmul.f32 %v924, %v928
    %vm930 = vweird.f32 %v667
    %vm931 = vweird.f32 %v924
    %vm932 = vmor %vm930, %vm931
    %v933 = vsel %vm932, %v924, %v929
    %v934 = vrsqrt.pop %v668
    %v935 = vmul.f32 %v934, %v668
    %v936 = vmul.f32 %v935, %v934
    %v937 = vmul.f32 0.5, %v936
    %v938 = vsub.f32 1.5, %v937
    %v939 = vmul.f32 %v934, %v938
    %vm940 = vweird.f32 %v668
    %vm941 = vweird.f32 %v934
    %vm942 = vmor %vm940, %vm941
    %v943 = vsel %vm942, %v934, %v939
    %v944 = vrsqrt.pop %v669
    %v945 = vmul.f32 %v944, %v669
    %v946 = vmul.f32 %v945, %v944
    %v947 = vmul.f32 0.5, %v946
    %v948 = vsub.f32 1.5, %v947
    %v949 = vmul.f32 %v944, %v948
    %vm950 = vweird.f32 %v669
    %vm951 = vweird.f32 %v944
    %vm952 = vmor %vm950, %vm951
    %v953 = vsel %vm952, %v944, %v949
    %v954 = vrsqrt.pop %v670
    %v955 = vmul.f32 %v954, %v670
    %v956 = vmul.f32 %v955, %v954
    %v957 = vmul.f32 0.5, %v956
    %v958 = vsub.f32 1.5, %v957
    %v959 = vmul.f32 %v954, %v958
    %vm960 = vweird.f32 %v670
    %vm961 = vweird.f32 %v954
    %vm962 = vmor %vm960, %vm961
    %v963 = vsel %vm962, %v954, %v959
    %v964 = vrsqrt.pop %v671
    %v965 = vmul.f32 %v964, %v671
    %v966 = vmul.f32 %v965, %v964
    %v967 = vmul.f32 0.5, %v966
    %v968 = vsub.f32 1.5, %v967
    %v969 = vmul.f32 %v964, %v968
    %vm970 = vweird.f32 %v671
    %vm971 = vweird.f32 %v964
    %vm972 = vmor %vm970, %vm971
    %v973 = vsel %vm972, %v964, %v969
    %v974 = vrsqrt.pop %v672
    %v975 = vmul.f32 %v974, %v672
    %v976 = vmul.f32 %v975, %v974
    %v977 = vmul.f32 0.5, %v976
    %v978 = vsub.f32 1.5, %v977
    %v979 = vmul.f32 %v974, %v978
    %vm980 = vweird.f32 %v672
    %vm981 = vweird.f32 %v974
    %vm982 = vmor %vm980, %vm981
    %v983 = vsel %vm982, %v974, %v979
    %v984 = vrsqrt.pop %v673
    %v985 = vmul.f32 %v984, %v673
    %v986 = vmul.f32 %v985, %v984
    %v987 = vmul.f32 0.5, %v986
    %v988 = vsub.f32 1.5, %v987
    %v989 = vmul.f32 %v984, %v988
    %vm990 = vweird.f32 %v673
    %vm991 = vweird.f32 %v984
    %vm992 = vmor %vm990, %vm991
    %v993 = vsel %vm992, %v984, %v989
    %v994 = vmul.f32 %v450, %v683
    %v995 = vmul.f32 %v451, %v693
    %v996 = vmul.f32 %v452, %v703
    %v997 = vmul.f32 %v453, %v713
    %v998 = vmul.f32 %v454, %v723
    %v999 = vmul.f32 %v455, %v733
    %v1000 = vmul.f32 %v456, %v743
    %v1001 = vmul.f32 %v457, %v753
    %v1002 = vmul.f32 %v458, %v763
    %v1003 = vmul.f32 %v459, %v773
    %v1004 = vmul.f32 %v460, %v783
    %v1005 = vmul.f32 %v461, %v793
    %v1006 = vmul.f32 %v462, %v803
    %v1007 = vmul.f32 %v463, %v813
    %v1008 = vmul.f32 %v464, %v823
    %v1009 = vmul.f32 %v465, %v833
    %v1010 = vmul.f32 %v466, %v843
    %v1011 = vmul.f32 %v467, %v853
    %v1012 = vmul.f32 %v468, %v863
    %v1013 = vmul.f32 %v469, %v873
    %v1014 = vmul.f32 %v470, %v883
    %v1015 = vmul.f32 %v471, %v893
    %v1016 = vmul.f32 %v472, %v903
    %v1017 = vmul.f32 %v473, %v913
    %v1018 = vmul.f32 %v474, %v923
    %v1019 = vmul.f32 %v475, %v933
    %v1020 = vmul.f32 %v476, %v943
    %v1021 = vmul.f32 %v477, %v953
    %v1022 = vmul.f32 %v478, %v963
    %v1023 = vmul.f32 %v479, %v973
    %v1024 = vmul.f32 %v480, %v983
    %v1025 = vmul.f32 %v481, %v993
    %v1026 = vld [vmem:[#allocation5] sm:$0x1]
    %v1027 = vld [vmem:[%s2] sm:$0x1]
    %v1029 = vperm.slane %v1026, 0
    %v1031 = vmul.f32 %v994, %v1029
    %v1032 = vmul.f32 %v995, %v1029
    %v1033 = vmul.f32 %v996, %v1029
    %v1034 = vmul.f32 %v997, %v1029
    %v1035 = vmul.f32 %v998, %v1029
    %v1036 = vmul.f32 %v999, %v1029
    %v1037 = vmul.f32 %v1000, %v1029
    %v1038 = vmul.f32 %v1001, %v1029
    %v1039 = vmul.f32 %v1002, %v1029
    %v1040 = vmul.f32 %v1003, %v1029
    %v1041 = vmul.f32 %v1004, %v1029
    %v1042 = vmul.f32 %v1005, %v1029
    %v1043 = vmul.f32 %v1006, %v1029
    %v1044 = vmul.f32 %v1007, %v1029
    %v1045 = vmul.f32 %v1008, %v1029
    %v1046 = vmul.f32 %v1009, %v1029
    %v1047 = vmul.f32 %v1010, %v1029
    %v1048 = vmul.f32 %v1011, %v1029
    %v1049 = vmul.f32 %v1012, %v1029
    %v1050 = vmul.f32 %v1013, %v1029
    %v1051 = vmul.f32 %v1014, %v1029
    %v1052 = vmul.f32 %v1015, %v1029
    %v1053 = vmul.f32 %v1016, %v1029
    %v1054 = vmul.f32 %v1017, %v1029
    %v1055 = vmul.f32 %v1018, %v1029
    %v1056 = vmul.f32 %v1019, %v1029
    %v1057 = vmul.f32 %v1020, %v1029
    %v1058 = vmul.f32 %v1021, %v1029
    %v1059 = vmul.f32 %v1022, %v1029
    %v1060 = vmul.f32 %v1023, %v1029
    %v1061 = vmul.f32 %v1024, %v1029
    %v1062 = vmul.f32 %v1025, %v1029
    %v1064 = vperm.slane %v1027, 0
    %v1066 = vadd.f32 %v1031, %v1064
    %v1067 = vadd.f32 %v1032, %v1064
    %v1068 = vadd.f32 %v1033, %v1064
    %v1069 = vadd.f32 %v1034, %v1064
    %v1070 = vadd.f32 %v1035, %v1064
    %v1071 = vadd.f32 %v1036, %v1064
    %v1072 = vadd.f32 %v1037, %v1064
    %v1073 = vadd.f32 %v1038, %v1064
    %v1074 = vadd.f32 %v1039, %v1064
    %v1075 = vadd.f32 %v1040, %v1064
    %v1076 = vadd.f32 %v1041, %v1064
    %v1077 = vadd.f32 %v1042, %v1064
    %v1078 = vadd.f32 %v1043, %v1064
    %v1079 = vadd.f32 %v1044, %v1064
    %v1080 = vadd.f32 %v1045, %v1064
    %v1081 = vadd.f32 %v1046, %v1064
    %v1082 = vadd.f32 %v1047, %v1064
    %v1083 = vadd.f32 %v1048, %v1064
    %v1084 = vadd.f32 %v1049, %v1064
    %v1085 = vadd.f32 %v1050, %v1064
    %v1086 = vadd.f32 %v1051, %v1064
    %v1087 = vadd.f32 %v1052, %v1064
    %v1088 = vadd.f32 %v1053, %v1064
    %v1089 = vadd.f32 %v1054, %v1064
    %v1090 = vadd.f32 %v1055, %v1064
    %v1091 = vadd.f32 %v1056, %v1064
    %v1092 = vadd.f32 %v1057, %v1064
    %v1093 = vadd.f32 %v1058, %v1064
    %v1094 = vadd.f32 %v1059, %v1064
    %v1095 = vadd.f32 %v1060, %v1064
    %v1096 = vadd.f32 %v1061, %v1064
    %v1097 = vadd.f32 %v1062, %v1064
    %v1098 = vrot.slane %v1068, 4
    %v1099 = vsel %vm90, %v1098, %v1066
    %v1101 = vunpack.c.l.s4 1983009808
    %v1102 = vunpack.c.0.s8 %v1101
    %v1103 = vperm.slane %v1099, %v1102
    %v1104 = vrot.slane %v1069, 4
    %v1105 = vsel %vm90, %v1104, %v1067
    %v1107 = vunpack.c.l.s4 1983009808
    %v1108 = vunpack.c.0.s8 %v1107
    %v1109 = vperm.slane %v1105, %v1108
    %v1110 = vrot.slane %v1072, 4
    %v1111 = vsel %vm90, %v1110, %v1070
    %v1113 = vunpack.c.l.s4 1983009808
    %v1114 = vunpack.c.0.s8 %v1113
    %v1115 = vperm.slane %v1111, %v1114
    %v1116 = vrot.slane %v1073, 4
    %v1117 = vsel %vm90, %v1116, %v1071
    %v1119 = vunpack.c.l.s4 1983009808
    %v1120 = vunpack.c.0.s8 %v1119
    %v1121 = vperm.slane %v1117, %v1120
    %v1122 = vrot.slane %v1109, 4
    %v1123 = vsel %vm90, %v1122, %v1103
    %v1124 = vrot.slane %v1103, 4
    %v1125 = vsel %vm90, %v1109, %v1124
    %v1127 = vunpack.c.l.s4 1934713408
    %v1128 = vunpack.c.0.s8 %v1127
    %v1129 = vperm.slane %v1123, %v1128
    %v1131 = vunpack.c.l.s4 1934713408
    %v1132 = vunpack.c.0.s8 %v1131
    %v1133 = vperm.slane %v1125, %v1132
    %v1134 = vrot.slane %v1121, 4
    %v1135 = vsel %vm90, %v1134, %v1115
    %v1136 = vrot.slane %v1115, 4
    %v1137 = vsel %vm90, %v1121, %v1136
    %v1139 = vunpack.c.l.s4 1934713408
    %v1140 = vunpack.c.0.s8 %v1139
    %v1141 = vperm.slane %v1135, %v1140
    %v1143 = vunpack.c.l.s4 1934713408
    %v1144 = vunpack.c.0.s8 %v1143
    %v1145 = vperm.slane %v1137, %v1144
    %v1146 = vrot.slane %v1141, 4
    %v1147 = vsel %vm90, %v1146, %v1129
    %v1148 = vrot.slane %v1129, 4
    %v1149 = vsel %vm90, %v1141, %v1148
    %v1150 = vrot.slane %v1145, 4
    %v1151 = vsel %vm90, %v1150, %v1133
    %v1152 = vrot.slane %v1133, 4
    %v1153 = vsel %vm90, %v1145, %v1152
    %v1154 = vrot.slane %v1076, 4
    %v1155 = vsel %vm90, %v1154, %v1074
    %v1157 = vunpack.c.l.s4 1983009808
    %v1158 = vunpack.c.0.s8 %v1157
    %v1159 = vperm.slane %v1155, %v1158
    %v1160 = vrot.slane %v1077, 4
    %v1161 = vsel %vm90, %v1160, %v1075
    %v1163 = vunpack.c.l.s4 1983009808
    %v1164 = vunpack.c.0.s8 %v1163
    %v1165 = vperm.slane %v1161, %v1164
    %v1166 = vrot.slane %v1080, 4
    %v1167 = vsel %vm90, %v1166, %v1078
    %v1169 = vunpack.c.l.s4 1983009808
    %v1170 = vunpack.c.0.s8 %v1169
    %v1171 = vperm.slane %v1167, %v1170
    %v1172 = vrot.slane %v1081, 4
    %v1173 = vsel %vm90, %v1172, %v1079
    %v1175 = vunpack.c.l.s4 1983009808
    %v1176 = vunpack.c.0.s8 %v1175
    %v1177 = vperm.slane %v1173, %v1176
    %v1178 = vrot.slane %v1165, 4
    %v1179 = vsel %vm90, %v1178, %v1159
    %v1180 = vrot.slane %v1159, 4
    %v1181 = vsel %vm90, %v1165, %v1180
    %v1183 = vunpack.c.l.s4 1934713408
    %v1184 = vunpack.c.0.s8 %v1183
    %v1185 = vperm.slane %v1179, %v1184
    %v1187 = vunpack.c.l.s4 1934713408
    %v1188 = vunpack.c.0.s8 %v1187
    %v1189 = vperm.slane %v1181, %v1188
    %v1190 = vrot.slane %v1177, 4
    %v1191 = vsel %vm90, %v1190, %v1171
    %v1192 = vrot.slane %v1171, 4
    %v1193 = vsel %vm90, %v1177, %v1192
    %v1195 = vunpack.c.l.s4 1934713408
    %v1196 = vunpack.c.0.s8 %v1195
    %v1197 = vperm.slane %v1191, %v1196
    %v1199 = vunpack.c.l.s4 1934713408
    %v1200 = vunpack.c.0.s8 %v1199
    %v1201 = vperm.slane %v1193, %v1200
    %v1202 = vrot.slane %v1197, 4
    %v1203 = vsel %vm90, %v1202, %v1185
    %v1204 = vrot.slane %v1185, 4
    %v1205 = vsel %vm90, %v1197, %v1204
    %v1206 = vrot.slane %v1201, 4
    %v1207 = vsel %vm90, %v1206, %v1189
    %v1208 = vrot.slane %v1189, 4
    %v1209 = vsel %vm90, %v1201, %v1208
    %v1210 = vrot.slane %v1084, 4
    %v1211 = vsel %vm90, %v1210, %v1082
    %v1213 = vunpack.c.l.s4 1983009808
    %v1214 = vunpack.c.0.s8 %v1213
    %v1215 = vperm.slane %v1211, %v1214
    %v1216 = vrot.slane %v1085, 4
    %v1217 = vsel %vm90, %v1216, %v1083
    %v1219 = vunpack.c.l.s4 1983009808
    %v1220 = vunpack.c.0.s8 %v1219
    %v1221 = vperm.slane %v1217, %v1220
    %v1222 = vrot.slane %v1088, 4
    %v1223 = vsel %vm90, %v1222, %v1086
    %v1225 = vunpack.c.l.s4 1983009808
    %v1226 = vunpack.c.0.s8 %v1225
    %v1227 = vperm.slane %v1223, %v1226
    %v1228 = vrot.slane %v1089, 4
    %v1229 = vsel %vm90, %v1228, %v1087
    %v1231 = vunpack.c.l.s4 1983009808
    %v1232 = vunpack.c.0.s8 %v1231
    %v1233 = vperm.slane %v1229, %v1232
    %v1234 = vrot.slane %v1221, 4
    %v1235 = vsel %vm90, %v1234, %v1215
    %v1236 = vrot.slane %v1215, 4
    %v1237 = vsel %vm90, %v1221, %v1236
    %v1239 = vunpack.c.l.s4 1934713408
    %v1240 = vunpack.c.0.s8 %v1239
    %v1241 = vperm.slane %v1235, %v1240
    %v1243 = vunpack.c.l.s4 1934713408
    %v1244 = vunpack.c.0.s8 %v1243
    %v1245 = vperm.slane %v1237, %v1244
    %v1246 = vrot.slane %v1233, 4
    %v1247 = vsel %vm90, %v1246, %v1227
    %v1248 = vrot.slane %v1227, 4
    %v1249 = vsel %vm90, %v1233, %v1248
    %v1251 = vunpack.c.l.s4 1934713408
    %v1252 = vunpack.c.0.s8 %v1251
    %v1253 = vperm.slane %v1247, %v1252
    %v1255 = vunpack.c.l.s4 1934713408
    %v1256 = vunpack.c.0.s8 %v1255
    %v1257 = vperm.slane %v1249, %v1256
    %v1258 = vrot.slane %v1253, 4
    %v1259 = vsel %vm90, %v1258, %v1241
    %v1260 = vrot.slane %v1241, 4
    %v1261 = vsel %vm90, %v1253, %v1260
    %v1262 = vrot.slane %v1257, 4
    %v1263 = vsel %vm90, %v1262, %v1245
    %v1264 = vrot.slane %v1245, 4
    %v1265 = vsel %vm90, %v1257, %v1264
    %v1266 = vrot.slane %v1092, 4
    %v1267 = vsel %vm90, %v1266, %v1090
    %v1269 = vunpack.c.l.s4 1983009808
    %v1270 = vunpack.c.0.s8 %v1269
    %v1271 = vperm.slane %v1267, %v1270
    %v1272 = vrot.slane %v1093, 4
    %v1273 = vsel %vm90, %v1272, %v1091
    %v1275 = vunpack.c.l.s4 1983009808
    %v1276 = vunpack.c.0.s8 %v1275
    %v1277 = vperm.slane %v1273, %v1276
    %v1278 = vrot.slane %v1096, 4
    %v1279 = vsel %vm90, %v1278, %v1094
    %v1281 = vunpack.c.l.s4 1983009808
    %v1282 = vunpack.c.0.s8 %v1281
    %v1283 = vperm.slane %v1279, %v1282
    %v1284 = vrot.slane %v1097, 4
    %v1285 = vsel %vm90, %v1284, %v1095
    %v1287 = vunpack.c.l.s4 1983009808
    %v1288 = vunpack.c.0.s8 %v1287
    %v1289 = vperm.slane %v1285, %v1288
    %v1290 = vrot.slane %v1277, 4
    %v1291 = vsel %vm90, %v1290, %v1271
    %v1292 = vrot.slane %v1271, 4
    %v1293 = vsel %vm90, %v1277, %v1292
    %v1295 = vunpack.c.l.s4 1934713408
    %v1296 = vunpack.c.0.s8 %v1295
    %v1297 = vperm.slane %v1291, %v1296
    %v1299 = vunpack.c.l.s4 1934713408
    %v1300 = vunpack.c.0.s8 %v1299
    %v1301 = vperm.slane %v1293, %v1300
    %v1302 = vrot.slane %v1289, 4
    %v1303 = vsel %vm90, %v1302, %v1283
    %v1304 = vrot.slane %v1283, 4
    %v1305 = vsel %vm90, %v1289, %v1304
    %v1307 = vunpack.c.l.s4 1934713408
    %v1308 = vunpack.c.0.s8 %v1307
    %v1309 = vperm.slane %v1303, %v1308
    %v1311 = vunpack.c.l.s4 1934713408
    %v1312 = vunpack.c.0.s8 %v1311
    %v1313 = vperm.slane %v1305, %v1312
    %v1314 = vrot.slane %v1309, 4
    %v1315 = vsel %vm90, %v1314, %v1297
    %v1316 = vrot.slane %v1297, 4
    %v1317 = vsel %vm90, %v1309, %v1316
    %v1318 = vrot.slane %v1313, 4
    %v1319 = vsel %vm90, %v1318, %v1301
    %v1320 = vrot.slane %v1301, 4
    %v1321 = vsel %vm90, %v1313, %v1320
    %1326 = vrot.lane.b32.xlu0 %v1149, 32
    %v1327 = vpop.permute.xlu0 %1326
    %1328 = vrot.lane.b32.xlu0 %v1205, 32
    %v1329 = vpop.permute.xlu0 %1328
    %1330 = vrot.lane.b32.xlu0 %v1261, 32
    %v1331 = vpop.permute.xlu0 %1330
    %1332 = vrot.lane.b32.xlu0 %v1317, 32
    %v1333 = vpop.permute.xlu0 %1332
    %1342 = vrot.lane.b32.xlu0 %v1151, 64
    %v1343 = vpop.permute.xlu0 %1342
    %1344 = vrot.lane.b32.xlu0 %v1207, 64
    %v1345 = vpop.permute.xlu0 %1344
    %1346 = vrot.lane.b32.xlu0 %v1263, 64
    %v1347 = vpop.permute.xlu0 %1346
    %1348 = vrot.lane.b32.xlu0 %v1319, 64
    %v1349 = vpop.permute.xlu0 %1348
    %1358 = vrot.lane.b32.xlu0 %v1153, 96
    %v1359 = vpop.permute.xlu0 %1358
    %1360 = vrot.lane.b32.xlu0 %v1209, 96
    %v1361 = vpop.permute.xlu0 %1360
    %1362 = vrot.lane.b32.xlu0 %v1265, 96
    %v1363 = vpop.permute.xlu0 %1362
    %1364 = vrot.lane.b32.xlu0 %v1321, 96
    %v1365 = vpop.permute.xlu0 %1364
    %vm1370 = vcmask 261120
    %v1371 = vsel %vm1370, %v1147, %v1327
    %v1372 = vsel %vm1370, %v1203, %v1329
    %v1373 = vsel %vm1370, %v1259, %v1331
    %v1374 = vsel %vm1370, %v1315, %v1333
    %vm1375 = vcmask 523264
    %v1376 = vsel %vm1375, %v1371, %v1343
    %v1377 = vsel %vm1375, %v1372, %v1345
    %v1378 = vsel %vm1375, %v1373, %v1347
    %v1379 = vsel %vm1375, %v1374, %v1349
    %vm1380 = vcmask 785408
    %v1381 = vsel %vm1380, %v1376, %v1359
    %v1382 = vsel %vm1380, %v1377, %v1361
    %v1383 = vsel %vm1380, %v1378, %v1363
    %v1384 = vsel %vm1380, %v1379, %v1365
    %1385 = vst [vmem:[#allocation7] sm:$0xff] %v1381
    %1386 = vst [vmem:[#allocation7 + $0x8] sm:$0xff] %v1382
    %1387 = vst [vmem:[#allocation7 + $0x10] sm:$0xff] %v1383
    %1388 = vst [vmem:[#allocation7 + $0x18] sm:$0xff] %v1384
    // Predicated region
    $region22: #{tpu_custom_call.1} parent=1 // pred_check
      _
    $region23: #{tpu_custom_call.1} parent=1 // pred_check_branch
      %1390 = sbr.rel (0) target = $region25
    $region24: #{tpu_custom_call.1} parent=1 // pred_region
      %1392 = vsyncadd [#allocation4], 0
      %s1393 = sshll.u32 [#allocation7], 4
      %s1394 = int_to_ptr.vmem [resolvable:$true] %s1393
      %s1395 = sshll.u32 %s3, 4
      %s1396 = int_to_ptr.hbm [resolvable:$true] %s1395
      %1401 = dma.vmem_to_hbm [thread:$0]  %s1394, 512, %s1396, [#allocation4], 128, 128, 8
    $region25: #{tpu_custom_call.1} parent=1 // pred_fallthru
      _
    // Predicated region
    $region26: #{tpu_custom_call.1} parent=1 // pred_check
      _
    $region27: #{tpu_custom_call.1} parent=1 // pred_check_branch
      %1403 = sbr.rel (0) target = $region29
    $region28: #{tpu_custom_call.1} parent=1 // pred_region
      %1405 = dma.done [#allocation4], 512
    $region29: #{tpu_custom_call.1} parent=1 // pred_fallthru
      _
    %1406 = vsyncpa [#allocation3], 1
    %1407 = vsyncpa [#allocation6], 1
    %1408 = vsyncpa [#allocation4], 1

</llo_original>
